<compile_context>
chip_gen: v7x
topology: tpu7x:2x2x1
jax: 0.10.0
libtpu: 0.0.40
codegen_flags: <defaults>
</compile_context>

<pallas_src>
import functools
import math

import jax
import jax.numpy as jnp
from jax.experimental import pallas as pl
from jax.experimental.pallas import tpu as pltpu


# ----------------------------- Pallas kernels -----------------------------

def _layernorm_kernel(x_ref, g_ref, b_ref, o_ref, *, eps):
    x = x_ref[...].astype(jnp.float32)
    mean = jnp.mean(x, axis=-1, keepdims=True)
    var = jnp.mean((x - mean) * (x - mean), axis=-1, keepdims=True)
    xn = (x - mean) * jax.lax.rsqrt(var + eps)
    o_ref[...] = (xn * g_ref[...] + b_ref[...]).astype(o_ref.dtype)


def _bert_layer_kernel(x_ref, mask_ref,
                       wqkv_ref, bqkv_ref, wo_ref, bo_ref,
                       ln1_g_ref, ln1_b_ref,
                       wi_ref, bi_ref, wo2_ref, bo2_ref,
                       ln2_g_ref, ln2_b_ref,
                       o_ref, *, num_heads, eps):
    """One full BERT encoder layer for a single batch element, fully in VMEM.

    x_ref:   (S, H) activations of batch element b
    mask_ref:(1, 1, S) additive attention mask (0 / -1e9), f32
    """
    S, H = x_ref.shape
    Dh = H // num_heads
    scale = jnp.float32(1.0 / math.sqrt(Dh))

    def mm(a_f32, w_ref, b_ref):
        # bf16 MXU inputs, f32 accumulation; bias added in f32.
        return jnp.dot(a_f32.astype(jnp.bfloat16),
                       w_ref[...].astype(jnp.bfloat16),
                       preferred_element_type=jnp.float32) + b_ref[...]

    def layernorm(y, g_ref, b_ref):
        mean = jnp.mean(y, axis=-1, keepdims=True)
        var = jnp.mean((y - mean) * (y - mean), axis=-1, keepdims=True)
        return (y - mean) * jax.lax.rsqrt(var + eps) * g_ref[...] + b_ref[...]

    x = x_ref[...].astype(jnp.float32)                         # (S, H)

    # --- fused QKV projection -------------------------------------------------
    qkv = mm(x, wqkv_ref, bqkv_ref)                            # (S, 3H) f32
    q = qkv[:, :H]
    k = qkv[:, H:2 * H]
    v = qkv[:, 2 * H:]

    # head split (S, H) -> (nH, S, Dh): static lane slices, VMEM-resident.
    qh = jnp.stack([q[:, h * Dh:(h + 1) * Dh] for h in range(num_heads)], axis=0)
    kh = jnp.stack([k[:, h * Dh:(h + 1) * Dh] for h in range(num_heads)], axis=0)
    vh = jnp.stack([v[:, h * Dh:(h + 1) * Dh] for h in range(num_heads)], axis=0)

    # --- multi-head attention, all heads in one batched einsum ----------------
    s = jnp.einsum("hqd,hkd->hqk",
                   qh.astype(jnp.bfloat16), kh.astype(jnp.bfloat16),
                   preferred_element_type=jnp.float32) * scale  # (nH, S, S) f32
    s = s + mask_ref[...]                                       # (1,1,S) broadcast, f32
    m = jnp.max(s, axis=-1, keepdims=True)
    p = jnp.exp(s - m)
    p = p * pl.reciprocal(jnp.sum(p, axis=-1, keepdims=True), approx=True)
    ctx = jnp.einsum("hqk,hkd->hqd",
                     p.astype(jnp.bfloat16), vh.astype(jnp.bfloat16),
                     preferred_element_type=jnp.float32)        # (nH, S, Dh)

    # head merge (nH, S, Dh) -> (S, H)
    ctx2d = jnp.concatenate([ctx[h] for h in range(num_heads)], axis=-1)

    # --- output projection + residual + LayerNorm ------------------------------
    attn_out = mm(ctx2d, wo_ref, bo_ref)                        # (S, H)
    x1 = layernorm(x + attn_out, ln1_g_ref, ln1_b_ref)

    # --- FFN (GELU) + residual + LayerNorm -------------------------------------
    inter = mm(x1, wi_ref, bi_ref)                              # (S, I)
    # TODO(synk): HF BERT uses exact erf-GELU; tanh approximation used here.
    c = jnp.float32(math.sqrt(2.0 / math.pi))
    inter = 0.5 * inter * (1.0 + jnp.tanh(c * (inter + 0.044715 * inter * inter * inter)))

    ffn_out = mm(inter, wo2_ref, bo2_ref)                       # (S, H)
    x2 = layernorm(x1 + ffn_out, ln2_g_ref, ln2_b_ref)

    o_ref[...] = x2.astype(o_ref.dtype)


def _avgpool_kernel(x_ref, o_ref):
    # mean over the sequence axis (AdaptiveAvgPool2d((1, H)) + squeeze(1))
    x = x_ref[...].astype(jnp.float32)      # (B, S, H)
    o_ref[...] = jnp.mean(x, axis=1).astype(o_ref.dtype)


# ----------------------------- kernel wrappers -----------------------------

def pallas_layernorm(x, gamma, beta, eps=1e-12):
    # x: (M, H); gamma/beta already stored as (1, H)
    M, H = x.shape
    kernel = functools.partial(_layernorm_kernel, eps=eps)
    return pl.pallas_call(
        kernel,
        out_shape=jax.ShapeDtypeStruct((M, H), x.dtype),
        grid=(1,),
        in_specs=[pl.BlockSpec((M, H), lambda i: (0, 0)),
                  pl.BlockSpec((1, H), lambda i: (0, 0)),
                  pl.BlockSpec((1, H), lambda i: (0, 0))],
        out_specs=pl.BlockSpec((M, H), lambda i: (0, 0)),
    )(x, gamma, beta)


def pallas_bert_layer(x, add_mask, p, cfg):
    """Fused encoder layer: one pallas_call per layer, grid over batch."""
    B, S, H = x.shape
    nH = cfg["num_heads"]
    I = cfg["intermediate_size"]
    x_flat = x.reshape(B * S, H)

    kernel = functools.partial(_bert_layer_kernel, num_heads=nH,
                               eps=cfg["layer_norm_eps"])

    def wspec(shape):
        # weights / biases: same full block every grid step (no re-DMA on repeat)
        return pl.BlockSpec(shape, lambda b: (0, 0))

    out = pl.pallas_call(
        kernel,
        out_shape=jax.ShapeDtypeStruct((B * S, H), x.dtype),
        grid=(B,),
        in_specs=[
            pl.BlockSpec((S, H), lambda b: (b, 0)),        # activations of batch b
            pl.BlockSpec((1, 1, S), lambda b: (b, 0, 0)),  # additive mask of batch b
            wspec((H, 3 * H)), wspec((1, 3 * H)),          # fused QKV
            wspec((H, H)), wspec((1, H)),                  # attn output proj
            wspec((1, H)), wspec((1, H)),                  # attn LN
            wspec((H, I)), wspec((1, I)),                  # FFN in
            wspec((I, H)), wspec((1, H)),                  # FFN out
            wspec((1, H)), wspec((1, H)),                  # out LN
        ],
        out_specs=pl.BlockSpec((S, H), lambda b: (b, 0)),
        compiler_params=pltpu.CompilerParams(dimension_semantics=("parallel",)),
    )(x_flat, add_mask,
      p["wqkv"], p["bqkv"], p["wo"], p["bo"],
      p["attn_ln_g"], p["attn_ln_b"],
      p["wi"], p["bi"], p["wo2"], p["bo2"],
      p["out_ln_g"], p["out_ln_b"])
    return out.reshape(B, S, H)


def pallas_seq_avgpool(x):
    # x: (B, S, H) -> (B, H)
    B, S, H = x.shape
    return pl.pallas_call(
        _avgpool_kernel,
        out_shape=jax.ShapeDtypeStruct((B, H), x.dtype),
        grid=(1,),
        in_specs=[pl.BlockSpec((B, S, H), lambda i: (0, 0, 0))],
        out_specs=pl.BlockSpec((B, H), lambda i: (0, 0)),
    )(x)


# ----------------------------- model definition -----------------------------

CONFIG = dict(vocab_size=100, hidden_size=32, num_layers=2, num_heads=4,
              intermediate_size=64, max_position=16, type_vocab_size=2,
              layer_norm_eps=1e-12)


def init_params(key, cfg):
    H, I = cfg["hidden_size"], cfg["intermediate_size"]

    def normal(k, shape):
        return (0.02 * jax.random.normal(k, shape)).astype(jnp.float32)

    keys = iter(jax.random.split(key, 64))
    params = {
        "word_emb": normal(next(keys), (cfg["vocab_size"], H)),
        "pos_emb": normal(next(keys), (cfg["max_position"], H)),
        "type_emb": normal(next(keys), (cfg["type_vocab_size"], H)),
        "emb_ln_g": jnp.ones((1, H), jnp.float32),
        "emb_ln_b": jnp.zeros((1, H), jnp.float32),
        "layers": [],
    }
    for _ in range(cfg["num_layers"]):
        layer = {
            # QKV fused: [wq | wk | wv] -> (H, 3H), [bq | bk | bv] -> (1, 3H)
            "wqkv": normal(next(keys), (H, 3 * H)),
            "bqkv": jnp.zeros((1, 3 * H), jnp.float32),
            "wo": normal(next(keys), (H, H)), "bo": jnp.zeros((1, H), jnp.float32),
            "attn_ln_g": jnp.ones((1, H), jnp.float32),
            "attn_ln_b": jnp.zeros((1, H), jnp.float32),
            "wi": normal(next(keys), (H, I)), "bi": jnp.zeros((1, I), jnp.float32),
            "wo2": normal(next(keys), (I, H)), "bo2": jnp.zeros((1, H), jnp.float32),
            "out_ln_g": jnp.ones((1, H), jnp.float32),
            "out_ln_b": jnp.zeros((1, H), jnp.float32),
        }
        params["layers"].append(layer)
    return params


def bert_forward(params, input_ids, attention_mask, cfg, pooling_type="cls"):
    B, S = input_ids.shape
    H = cfg["hidden_size"]

    # Embeddings (gather done in plain-JAX glue; not the hot path).
    word = jnp.take(params["word_emb"], input_ids, axis=0)          # (B, S, H)
    pos = params["pos_emb"][:S][None, :, :]                         # (1, S, H)
    tok = params["type_emb"][0][None, None, :]                      # (1, 1, H)
    emb = (word + pos + tok).astype(jnp.float32)
    emb = pallas_layernorm(emb.reshape(B * S, H), params["emb_ln_g"],
                           params["emb_ln_b"], cfg["layer_norm_eps"]).reshape(B, S, H)

    # Additive attention mask: (B, 1, S), 0 for keep, -1e9 for masked (kept f32).
    add_mask = ((1.0 - attention_mask.astype(jnp.float32)) * -1e9)[:, None, :]

    hidden_states = [emb]
    x = emb
    for layer_params in params["layers"]:
        x = pallas_bert_layer(x, add_mask, layer_params, cfg)
        hidden_states.append(x)
    last_hidden_state = x

    if pooling_type == "cls":
        final = last_hidden_state[:, 0]
    elif pooling_type == "last_avg":
        final = pallas_seq_avgpool(last_hidden_state)
    elif pooling_type == "first_last_avg":
        first_avg = pallas_seq_avgpool(hidden_states[1])
        last_avg = pallas_seq_avgpool(hidden_states[-1])
        concat = jnp.stack([first_avg, last_avg], axis=1)           # (B, 2, H)
        final = pallas_seq_avgpool(concat)
    else:
        raise ValueError(
            "The value of pooling_type can only be:cls, last_avg or first_last_avg]")
    return final


# ----------------------------- main -----------------------------

if __name__ == "__main__":
    cfg = CONFIG
    key = jax.random.PRNGKey(0)
    k_params, k_ids = jax.random.split(key)

    params = init_params(k_params, cfg)

    B, S = 2, 8
    input_ids = jax.random.randint(k_ids, (B, S), 0, cfg["vocab_size"],
                                   dtype=jnp.int32)
    attention_mask = jnp.ones((B, S), jnp.int32).at[1, 6:].set(0)

    out_cls = bert_forward(params, input_ids, attention_mask, cfg, "cls")
    out_last = bert_forward(params, input_ids, attention_mask, cfg, "last_avg")
    out_fla = bert_forward(params, input_ids, attention_mask, cfg, "first_last_avg")

    jax.block_until_ready((out_cls, out_last, out_fla))
    assert out_cls.shape == (B, cfg["hidden_size"])
    assert out_last.shape == (B, cfg["hidden_size"])
    assert out_fla.shape == (B, cfg["hidden_size"])
    print("KERNEL_OK")
</pallas_src>

<mosaic_0001>
module attributes {stable_mosaic.version = 11 : i64} {
  func.func @_layernorm_kernel(%arg0: i32, %arg1: memref<16x32xf32, #tpu.memory_space<vmem>>, %arg2: memref<1x32xf32, #tpu.memory_space<vmem>>, %arg3: memref<1x32xf32, #tpu.memory_space<vmem>>, %arg4: memref<16x32xf32, #tpu.memory_space<vmem>>) attributes {dimension_semantics = [#tpu.dimension_semantics<arbitrary>], iteration_bounds = array<i64: 1>, scalar_prefetch = 0 : i64, scratch_operands = 0 : i64, tpu.core_type = #tpu.core_type<tc>, window_params = [{pipeline_mode = #tpu.pipeline_mode<synchronous>, transform_indices = @transform_0, window_bounds = array<i64: 16, 32>}, {pipeline_mode = #tpu.pipeline_mode<synchronous>, transform_indices = @transform_1, window_bounds = array<i64: 1, 32>}, {pipeline_mode = #tpu.pipeline_mode<synchronous>, transform_indices = @transform_2, window_bounds = array<i64: 1, 32>}, {pipeline_mode = #tpu.pipeline_mode<synchronous>, transform_indices = @transform_3, window_bounds = array<i64: 16, 32>}]} {
    %c0 = arith.constant 0 : index
    %c0_0 = arith.constant 0 : index
    %0 = vector.load %arg1[%c0, %c0_0] : memref<16x32xf32, #tpu.memory_space<vmem>>, vector<16x32xf32>
    %cst = arith.constant dense<0.000000e+00> : vector<16xf32>
    %1 = vector.multi_reduction <add>, %0, %cst [1] : vector<16x32xf32> to vector<16xf32>
    %2 = vector.shape_cast %1 : vector<16xf32> to vector<16x1xf32>
    %cst_1 = arith.constant 3.200000e+01 : f32
    %3 = vector.broadcast %cst_1 : f32 to vector<16x1xf32>
    %4 = arith.divf %2, %3 : vector<16x1xf32>
    %5 = vector.broadcast %4 : vector<16x1xf32> to vector<16x32xf32>
    %6 = arith.subf %0, %5 : vector<16x32xf32>
    %7 = vector.broadcast %4 : vector<16x1xf32> to vector<16x32xf32>
    %8 = arith.subf %0, %7 : vector<16x32xf32>
    %9 = arith.mulf %6, %8 : vector<16x32xf32>
    %cst_2 = arith.constant dense<0.000000e+00> : vector<16xf32>
    %10 = vector.multi_reduction <add>, %9, %cst_2 [1] : vector<16x32xf32> to vector<16xf32>
    %11 = vector.shape_cast %10 : vector<16xf32> to vector<16x1xf32>
    %cst_3 = arith.constant 3.200000e+01 : f32
    %12 = vector.broadcast %cst_3 : f32 to vector<16x1xf32>
    %13 = arith.divf %11, %12 : vector<16x1xf32>
    %14 = vector.broadcast %4 : vector<16x1xf32> to vector<16x32xf32>
    %15 = arith.subf %0, %14 : vector<16x32xf32>
    %cst_4 = arith.constant 9.99999996E-13 : f32
    %16 = vector.broadcast %cst_4 : f32 to vector<16x1xf32>
    %17 = arith.addf %13, %16 : vector<16x1xf32>
    %18 = math.rsqrt %17 : vector<16x1xf32>
    %19 = vector.broadcast %18 : vector<16x1xf32> to vector<16x32xf32>
    %20 = arith.mulf %15, %19 : vector<16x32xf32>
    %c0_5 = arith.constant 0 : index
    %c0_6 = arith.constant 0 : index
    %21 = vector.load %arg2[%c0_5, %c0_6] : memref<1x32xf32, #tpu.memory_space<vmem>>, vector<1x32xf32>
    %22 = vector.broadcast %21 : vector<1x32xf32> to vector<16x32xf32>
    %23 = arith.mulf %20, %22 : vector<16x32xf32>
    %c0_7 = arith.constant 0 : index
    %c0_8 = arith.constant 0 : index
    %24 = vector.load %arg3[%c0_7, %c0_8] : memref<1x32xf32, #tpu.memory_space<vmem>>, vector<1x32xf32>
    %25 = vector.broadcast %24 : vector<1x32xf32> to vector<16x32xf32>
    %26 = arith.addf %23, %25 : vector<16x32xf32>
    %c0_9 = arith.constant 0 : index
    %c0_10 = arith.constant 0 : index
    %27 = vector.load %arg4[%c0_9, %c0_10] : memref<16x32xf32, #tpu.memory_space<vmem>>, vector<16x32xf32>
    tpu.vector_store %arg4[%c0_9, %c0_10], %26 {strides = array<i32>} : memref<16x32xf32, #tpu.memory_space<vmem>>, vector<16x32xf32>,
    return
  }
  func.func @transform_0(%arg0: i32) -> (i32, i32) {
    %c0_i32 = arith.constant 0 : i32
    %c0_i32_0 = arith.constant 0 : i32
    %c0_i32_1 = arith.constant 0 : i32
    return %c0_i32, %c0_i32_0 : i32, i32
  }
  func.func @transform_1(%arg0: i32) -> (i32, i32) {
    %c0_i32 = arith.constant 0 : i32
    %c0_i32_0 = arith.constant 0 : i32
    %c0_i32_1 = arith.constant 0 : i32
    return %c0_i32, %c0_i32_0 : i32, i32
  }
  func.func @transform_2(%arg0: i32) -> (i32, i32) {
    %c0_i32 = arith.constant 0 : i32
    %c0_i32_0 = arith.constant 0 : i32
    %c0_i32_1 = arith.constant 0 : i32
    return %c0_i32, %c0_i32_0 : i32, i32
  }
  func.func @transform_3(%arg0: i32) -> (i32, i32) {
    %c0_i32 = arith.constant 0 : i32
    %c0_i32_0 = arith.constant 0 : i32
    %c0_i32_1 = arith.constant 0 : i32
    return %c0_i32, %c0_i32_0 : i32, i32
  }
}

</mosaic_0001>

<llo_original>
// kernel: tpu_custom_call.1
$region0: #{tpu_custom_call.1}
  #allocation0 [shape = 'u32[]', space=smem, size = 0x4, offset = 0x4, fixed_abs, tag = 'smem constant byte address 0x4 - core index']
  #allocation1 [shape = 'u32[144,128]{1,0:T(1,128)}', space=vmem, size = 0x12000, scoped, tag = 'internal scratch']
  %s0 = inlined_call_operand.hbm [shape: f32[16,32], index: 0, kind: input, shape index: {}]
  %s1 = inlined_call_operand.vmem [shape: f32[1,32], index: 1, kind: input, shape index: {}]
  %s2 = inlined_call_operand.vmem [shape: f32[1,32], index: 2, kind: input, shape index: {}]
  %s3 = inlined_call_operand.hbm [shape: f32[16,32], index: 3, kind: output, shape index: {}]
  %s4 = sld [smem:[#allocation0]]
  $region26: #{tpu_custom_call.1} parent=0
    _
  %s6 = ssub.s32 1, %s4
  %s7 = scalar_select 0, %s6, %s4
  $region1: #{tpu_custom_call.1} parent=0
    #allocation2 [shape = 'u8[8192]{0}', space=vmem, size = 0x2000, scoped, tag = 'input window, operand 0, single buffered']
    #allocation3 [shape = 's32[1]{0}', space=sflag, size = 0x4, scoped, tag = 'scoped memory for tpu_custom_call.1']
    #allocation4 [shape = 's32[1]{0}', space=sflag, size = 0x4, scoped, tag = 'scoped memory for tpu_custom_call.1']
    #allocation5 [shape = 'u8[8192]{0}', space=vmem, size = 0x2000, scoped, tag = 'output window, operand 0, single buffered']
    %8 = vsyncpa [#allocation3], 0
    %9 = vsyncpa [#allocation4], 0
    // Predicated region
    $region2: #{tpu_custom_call.1} parent=1 // pred_check
      _
    $region3: #{tpu_custom_call.1} parent=1 // pred_check_branch
      %11 = sbr.rel (0) target = $region5
    $region4: #{tpu_custom_call.1} parent=1 // pred_region
      %s13 = ssub.s32 256, 256
      %14 = vsyncadd [#allocation3], %s13
      %s15 = sshll.u32 [#allocation2], 4
      %s16 = int_to_ptr.vmem [resolvable:$true] %s15
      %21 = dma.hbm_to_vmem [thread:$0]  %s0, 256, %s16, [#allocation3], 128, 128, 8
    $region5: #{tpu_custom_call.1} parent=1 // pred_fallthru
      _
    // Predicated region
    $region6: #{tpu_custom_call.1} parent=1 // pred_check
      _
    $region7: #{tpu_custom_call.1} parent=1 // pred_check_branch
      %23 = sbr.rel (0) target = $region9
    $region8: #{tpu_custom_call.1} parent=1 // pred_region
      _
    $region9: #{tpu_custom_call.1} parent=1 // pred_fallthru
      _
    // Predicated region
    $region10: #{tpu_custom_call.1} parent=1 // pred_check
      _
    $region11: #{tpu_custom_call.1} parent=1 // pred_check_branch
      %25 = sbr.rel (0) target = $region13
    $region12: #{tpu_custom_call.1} parent=1 // pred_region
      _
    $region13: #{tpu_custom_call.1} parent=1 // pred_fallthru
      _
    // Predicated region
    $region14: #{tpu_custom_call.1} parent=1 // pred_check
      _
    $region15: #{tpu_custom_call.1} parent=1 // pred_check_branch
      %27 = sbr.rel (0) target = $region17
    $region16: #{tpu_custom_call.1} parent=1 // pred_region
      %28 = dma.done [#allocation3], 256
    $region17: #{tpu_custom_call.1} parent=1 // pred_fallthru
      _
    %v29 = vld [vmem:[#allocation2] sm:$0xff]
    %v30 = vld [vmem:[#allocation2 + $0x8] sm:$0xff]
    %vm31 = vcmask 261120
    %v32 = vsel %vm31, %v29, 0.0
    %33 = vadd.xlane.f32.xlu0 %v32
    %v34 = vpop.xlane.xlu0 %33
    %v35 = vsel %vm31, %v30, 0.0
    %36 = vadd.xlane.f32.xlu0 %v35
    %v37 = vpop.xlane.xlu0 %36
    %v38 = vrcp.pop 32.0
    %v39 = vmul.f32 %v34, %v38
    %v40 = vmul.f32 %v37, %v38
    %v41 = vsub.f32 %v29, %v39
    %v42 = vsub.f32 %v30, %v40
    %v43 = vmul.f32 %v41, %v41
    %v44 = vmul.f32 %v42, %v42
    %v45 = vsel %vm31, %v43, 0.0
    %46 = vadd.xlane.f32.xlu0 %v45
    %v47 = vpop.xlane.xlu0 %46
    %v48 = vsel %vm31, %v44, 0.0
    %49 = vadd.xlane.f32.xlu0 %v48
    %v50 = vpop.xlane.xlu0 %49
    %v51 = vmul.f32 %v47, %v38
    %v52 = vmul.f32 %v50, %v38
    %v53 = vadd.f32 %v51, 1e-12
    %v54 = vadd.f32 %v52, 1e-12
    %v55 = vrsqrt.pop %v53
    %v56 = vrsqrt.pop %v54
    %v57 = vmul.f32 %v41, %v55
    %v58 = vmul.f32 %v42, %v56
    %v59 = vld [vmem:[%s1] sm:$0x1]
    %v61 = vlaneseq
    %v62 = vshrl.u32 %v61, 7
    %v63 = vsub.s32 0, %v62
    %v64 = vrot.slane %v59, %v63
    %v66 = vmul.f32 %v57, %v64
    %v67 = vmul.f32 %v58, %v64
    %v68 = vld [vmem:[%s2] sm:$0x1]
    %v70 = vlaneseq
    %v71 = vshrl.u32 %v70, 7
    %v72 = vsub.s32 0, %v71
    %v73 = vrot.slane %v68, %v72
    %v75 = vadd.f32 %v66, %v73
    %v76 = vadd.f32 %v67, %v73
    %77 = vst.msk [vmem:[#allocation5] sm:$0xff] %vm31, %v75
    %78 = vst.msk [vmem:[#allocation5 + $0x8] sm:$0xff] %vm31, %v76
    // Predicated region
    $region18: #{tpu_custom_call.1} parent=1 // pred_check
      _
    $region19: #{tpu_custom_call.1} parent=1 // pred_check_branch
      %80 = sbr.rel (0) target = $region21
    $region20: #{tpu_custom_call.1} parent=1 // pred_region
      %s82 = ssub.s32 256, 256
      %83 = vsyncadd [#allocation4], %s82
      %s84 = sshll.u32 [#allocation5], 4
      %s85 = int_to_ptr.vmem [resolvable:$true] %s84
      %90 = dma.vmem_to_hbm [thread:$0]  %s85, 256, %s3, [#allocation4], 128, 128, 8
    $region21: #{tpu_custom_call.1} parent=1 // pred_fallthru
      _
    // Predicated region
    $region22: #{tpu_custom_call.1} parent=1 // pred_check
      _
    $region23: #{tpu_custom_call.1} parent=1 // pred_check_branch
      %92 = sbr.rel (0) target = $region25
    $region24: #{tpu_custom_call.1} parent=1 // pred_region
      %93 = dma.done [#allocation4], 256
    $region25: #{tpu_custom_call.1} parent=1 // pred_fallthru
      _
    %94 = vsyncpa [#allocation3], 1
    %95 = vsyncpa [#allocation4], 1

</llo_original>
